<compile_context>
chip_gen: v6e
topology: v6e:2x2x1
jax: 0.10.0
libtpu: 0.0.40
codegen_flags: <defaults>
</compile_context>

<pallas_src>
import jax
import jax.numpy as jnp
from jax.experimental import pallas as pl
from jax.experimental.pallas import tpu as pltpu


def mlp_kernel(x1_ref, x2_ref, w1_ref, b1_ref, w2_ref, b2_ref, o_ref, xcat_ref):
    H = x1_ref.shape[1]

    # Assemble cat(x1, x2) in VMEM with two static lane-range stores,
    # casting f32 -> bf16 in-kernel (VPU op, hidden under the input DMA).
    xcat_ref[:, :H] = x1_ref[...].astype(jnp.bfloat16)
    xcat_ref[:, H:] = x2_ref[...].astype(jnp.bfloat16)

    # Layer 1: single K=2H bf16 matmul, f32 MXU accumulation, bias + ReLU.
    h = jnp.dot(xcat_ref[...], w1_ref[...], preferred_element_type=jnp.float32)
    h = jnp.maximum(h + b1_ref[...], 0.0)

    # Layer 2: bf16 matmul (OUT=2), f32 accumulation.
    logits = jnp.dot(h.astype(jnp.bfloat16), w2_ref[...],
                     preferred_element_type=jnp.float32) + b2_ref[...]

    # Closed-form 2-class log_softmax (no axis-1 reduction on a lane-sparse vreg):
    #   lse = max(l0, l1) + log1p(exp(-|l0 - l1|))
    l0 = logits[:, 0:1]
    l1 = logits[:, 1:2]
    m = jnp.maximum(l0, l1)
    lse = m + jnp.log1p(jnp.exp(-jnp.abs(l0 - l1)))
    o_ref[...] = (logits - lse).astype(o_ref.dtype)


def _round_up(x, m):
    return (x + m - 1) // m * m


def baseline_mlp_forward(emb_motif, emb_motif_mod, w1, b1, w2, b2, *, block_b=8192):
    """y = log_softmax(relu(cat(x1, x2) @ w1 + b1) @ w2 + b2, axis=1).

    w1: (2H, 256), w2: (256, 2) -- transposed relative to nn.Linear.weight.
    """
    B, H = emb_motif.shape
    MID = w1.shape[1]
    OUT = w2.shape[1]
    assert w1.shape[0] == 2 * H, "w1 must be (2*hidden, 256)"
    assert OUT == 2, "kernel epilogue is specialized to the 2-class head"
    block_b = _round_up(block_b, 16)

    # Tiny one-time parameter casts/reshapes (weights stay VMEM-resident).
    # Activations are NOT touched here: the bf16 cast happens in-kernel.
    w1_b = w1.astype(jnp.bfloat16)
    b1_b = b1.reshape(1, MID).astype(jnp.float32)
    w2_b = w2.astype(jnp.bfloat16)
    b2_b = b2.reshape(1, OUT).astype(jnp.float32)

    # Batch tile selection (no padding; ragged final block handled by Pallas):
    #  - whole batch in one block if it fits (block == full dim is always legal),
    #  - but force >=2 grid steps for large single-tile batches so the
    #    "parallel" axis shards across v7x's two TensorCores,
    #  - otherwise a multiple-of-16 tile (bf16 sublane packing).
    if B <= block_b:
        if B > 4096:
            tb = _round_up((B + 1) // 2, 16)   # >=2 steps on v7x
        else:
            tb = B
    else:
        tb = block_b
    grid = (pl.cdiv(B, tb),)

    out = pl.pallas_call(
        mlp_kernel,
        out_shape=jax.ShapeDtypeStruct((B, OUT), jnp.float32),
        grid=grid,
        in_specs=[
            pl.BlockSpec((tb, H), lambda i: (i, 0)),        # x1 tile (streamed)
            pl.BlockSpec((tb, H), lambda i: (i, 0)),        # x2 tile (streamed)
            pl.BlockSpec((2 * H, MID), lambda i: (0, 0)),   # w1 (VMEM-resident)
            pl.BlockSpec((1, MID), lambda i: (0, 0)),       # b1 (VMEM-resident)
            pl.BlockSpec((MID, OUT), lambda i: (0, 0)),     # w2 (VMEM-resident)
            pl.BlockSpec((1, OUT), lambda i: (0, 0)),       # b2 (VMEM-resident)
        ],
        out_specs=pl.BlockSpec((tb, OUT), lambda i: (i, 0)),
        scratch_shapes=[pltpu.VMEM((tb, 2 * H), jnp.bfloat16)],  # concat LHS
        compiler_params=pltpu.CompilerParams(
            dimension_semantics=("parallel",),
            vmem_limit_bytes=48 * 1024 * 1024,
        ),
    )(emb_motif, emb_motif_mod, w1_b, b1_b, w2_b, b2_b)

    return out


def reference_forward(emb_motif, emb_motif_mod, w1, b1, w2, b2):
    # Pure-JAX reference with the same bf16/f32-accumulate numerics the kernel uses.
    x = jnp.concatenate([emb_motif, emb_motif_mod], axis=1).astype(jnp.bfloat16)
    h = jnp.dot(x, w1.astype(jnp.bfloat16), preferred_element_type=jnp.float32)
    h = jnp.maximum(h + b1.reshape(1, -1), 0.0)
    logits = jnp.dot(h.astype(jnp.bfloat16), w2.astype(jnp.bfloat16),
                     preferred_element_type=jnp.float32) + b2.reshape(1, -1)
    return jax.nn.log_softmax(logits, axis=1)


if __name__ == "__main__":
    # Small shapes consistent with the module: hidden_dim=32 -> mlp input 2*32.
    B, H = 8, 32
    MID, OUT = 256, 2

    key = jax.random.PRNGKey(0)
    k1, k2, k3, k4, k5, k6 = jax.random.split(key, 6)

    emb_motif = jax.random.normal(k1, (B, H), dtype=jnp.float32)
    emb_motif_mod = jax.random.normal(k2, (B, H), dtype=jnp.float32)

    # Synthetic parameters (shapes from nn.Linear(2H,256), nn.Linear(256,2)),
    # stored as (in_features, out_features).
    w1 = jax.random.normal(k3, (2 * H, MID), dtype=jnp.float32) * 0.05
    b1 = jax.random.normal(k4, (1, MID), dtype=jnp.float32) * 0.05
    w2 = jax.random.normal(k5, (MID, OUT), dtype=jnp.float32) * 0.05
    b2 = jax.random.normal(k6, (1, OUT), dtype=jnp.float32) * 0.05

    out = baseline_mlp_forward(emb_motif, emb_motif_mod, w1, b1, w2, b2)
    out = jax.block_until_ready(out)
    assert out.shape == (B, OUT)

    ref = reference_forward(emb_motif, emb_motif_mod, w1, b1, w2, b2)
    assert jnp.allclose(out, ref, atol=2e-2, rtol=2e-2), "mismatch vs reference"

    print("KERNEL_OK")
</pallas_src>

<mosaic_0001>
module attributes {stable_mosaic.version = 11 : i64} {
  func.func @mlp_kernel(%arg0: i32, %arg1: memref<8x32xf32, #tpu.memory_space<vmem>>, %arg2: memref<8x32xf32, #tpu.memory_space<vmem>>, %arg3: memref<64x256xbf16, #tpu.memory_space<vmem>>, %arg4: memref<1x256xf32, #tpu.memory_space<vmem>>, %arg5: memref<256x2xbf16, #tpu.memory_space<vmem>>, %arg6: memref<1x2xf32, #tpu.memory_space<vmem>>, %arg7: memref<8x2xf32, #tpu.memory_space<vmem>>, %arg8: memref<8x64xbf16, #tpu.memory_space<vmem>>) attributes {dimension_semantics = [#tpu.dimension_semantics<parallel>], iteration_bounds = array<i64: 1>, scalar_prefetch = 0 : i64, scratch_operands = 1 : i64, tpu.core_type = #tpu.core_type<tc>, window_params = [{transform_indices = @transform_0, window_bounds = array<i64: 8, 32>}, {transform_indices = @transform_1, window_bounds = array<i64: 8, 32>}, {pipeline_mode = #tpu.pipeline_mode<synchronous>, transform_indices = @transform_2, window_bounds = array<i64: 64, 256>}, {pipeline_mode = #tpu.pipeline_mode<synchronous>, transform_indices = @transform_3, window_bounds = array<i64: 1, 256>}, {pipeline_mode = #tpu.pipeline_mode<synchronous>, transform_indices = @transform_4, window_bounds = array<i64: 256, 2>}, {pipeline_mode = #tpu.pipeline_mode<synchronous>, transform_indices = @transform_5, window_bounds = array<i64: 1, 2>}, {transform_indices = @transform_6, window_bounds = array<i64: 8, 2>}]} {
    %c0 = arith.constant 0 : index
    %c0_0 = arith.constant 0 : index
    %0 = vector.load %arg1[%c0, %c0_0] : memref<8x32xf32, #tpu.memory_space<vmem>>, vector<8x32xf32>
    %1 = arith.truncf %0 : vector<8x32xf32> to vector<8x32xbf16>
    %c0_1 = arith.constant 0 : index
    %c0_2 = arith.constant 0 : index
    %2 = vector.load %arg8[%c0_1, %c0_2] : memref<8x64xbf16, #tpu.memory_space<vmem>>, vector<8x32xbf16>
    tpu.vector_store %arg8[%c0_1, %c0_2], %1 {strides = array<i32>} : memref<8x64xbf16, #tpu.memory_space<vmem>>, vector<8x32xbf16>,
    %c0_3 = arith.constant 0 : index
    %c0_4 = arith.constant 0 : index
    %3 = vector.load %arg2[%c0_3, %c0_4] : memref<8x32xf32, #tpu.memory_space<vmem>>, vector<8x32xf32>
    %4 = arith.truncf %3 : vector<8x32xf32> to vector<8x32xbf16>
    %c0_5 = arith.constant 0 : index
    %c32 = arith.constant 32 : index
    %5 = vector.load %arg8[%c0_5, %c32] : memref<8x64xbf16, #tpu.memory_space<vmem>>, vector<8x32xbf16>
    tpu.vector_store %arg8[%c0_5, %c32], %4 {strides = array<i32>} : memref<8x64xbf16, #tpu.memory_space<vmem>>, vector<8x32xbf16>,
    %c0_6 = arith.constant 0 : index
    %c0_7 = arith.constant 0 : index
    %6 = vector.load %arg8[%c0_6, %c0_7] : memref<8x64xbf16, #tpu.memory_space<vmem>>, vector<8x64xbf16>
    %c0_8 = arith.constant 0 : index
    %c0_9 = arith.constant 0 : index
    %7 = vector.load %arg3[%c0_8, %c0_9] : memref<64x256xbf16, #tpu.memory_space<vmem>>, vector<64x256xbf16>
    %cst = arith.constant dense<0.000000e+00> : vector<8x256xf32>
    %8 = tpu.matmul %6, %7, %cst {dimension_numbers = #tpu.dot_dimension_numbers<[1], [0], [0], [1], [0, 0, 1, 1], [], []>} : vector<8x64xbf16>, vector<64x256xbf16>, vector<8x256xf32> -> vector<8x256xf32>
    %c0_10 = arith.constant 0 : index
    %c0_11 = arith.constant 0 : index
    %9 = vector.load %arg4[%c0_10, %c0_11] : memref<1x256xf32, #tpu.memory_space<vmem>>, vector<1x256xf32>
    %10 = vector.broadcast %9 : vector<1x256xf32> to vector<8x256xf32>
    %11 = arith.addf %8, %10 : vector<8x256xf32>
    %cst_12 = arith.constant 0.000000e+00 : f32
    %12 = vector.broadcast %cst_12 : f32 to vector<8x256xf32>
    %13 = arith.maximumf %11, %12 : vector<8x256xf32>
    %14 = arith.truncf %13 : vector<8x256xf32> to vector<8x256xbf16>
    %c0_13 = arith.constant 0 : index
    %c0_14 = arith.constant 0 : index
    %15 = vector.load %arg5[%c0_13, %c0_14] : memref<256x2xbf16, #tpu.memory_space<vmem>>, vector<256x2xbf16>
    %cst_15 = arith.constant dense<0.000000e+00> : vector<8x2xf32>
    %16 = tpu.matmul %14, %15, %cst_15 {dimension_numbers = #tpu.dot_dimension_numbers<[1], [0], [0], [1], [0, 0, 1, 1], [], []>} : vector<8x256xbf16>, vector<256x2xbf16>, vector<8x2xf32> -> vector<8x2xf32>
    %c0_16 = arith.constant 0 : index
    %c0_17 = arith.constant 0 : index
    %17 = vector.load %arg6[%c0_16, %c0_17] : memref<1x2xf32, #tpu.memory_space<vmem>>, vector<1x2xf32>
    %18 = vector.broadcast %17 : vector<1x2xf32> to vector<8x2xf32>
    %19 = arith.addf %16, %18 : vector<8x2xf32>
    %20 = vector.extract_strided_slice %19 {offsets = [0, 0], sizes = [8, 1], strides = [1, 1]} : vector<8x2xf32> to vector<8x1xf32>
    %21 = vector.extract_strided_slice %19 {offsets = [0, 1], sizes = [8, 1], strides = [1, 1]} : vector<8x2xf32> to vector<8x1xf32>
    %22 = arith.maximumf %20, %21 : vector<8x1xf32>
    %23 = arith.subf %20, %21 : vector<8x1xf32>
    %24 = math.absf %23 : vector<8x1xf32>
    %cst_18 = arith.constant 0.000000e+00 : f32
    %25 = vector.broadcast %cst_18 : f32 to vector<8x1xf32>
    %26 = arith.subf %25, %24 : vector<8x1xf32>
    %27 = math.exp %26 : vector<8x1xf32>
    %28 = math.log1p %27 : vector<8x1xf32>
    %29 = arith.addf %22, %28 : vector<8x1xf32>
    %30 = vector.broadcast %29 : vector<8x1xf32> to vector<8x2xf32>
    %31 = arith.subf %19, %30 : vector<8x2xf32>
    %c0_19 = arith.constant 0 : index
    %c0_20 = arith.constant 0 : index
    %32 = vector.load %arg7[%c0_19, %c0_20] : memref<8x2xf32, #tpu.memory_space<vmem>>, vector<8x2xf32>
    tpu.vector_store %arg7[%c0_19, %c0_20], %31 {strides = array<i32>} : memref<8x2xf32, #tpu.memory_space<vmem>>, vector<8x2xf32>,
    return
  }
  func.func @transform_0(%arg0: i32) -> (i32, i32) {
    %c0_i32 = arith.constant 0 : i32
    %c0_i32_0 = arith.constant 0 : i32
    return %arg0, %c0_i32 : i32, i32
  }
  func.func @transform_1(%arg0: i32) -> (i32, i32) {
    %c0_i32 = arith.constant 0 : i32
    %c0_i32_0 = arith.constant 0 : i32
    return %arg0, %c0_i32 : i32, i32
  }
  func.func @transform_2(%arg0: i32) -> (i32, i32) {
    %c0_i32 = arith.constant 0 : i32
    %c0_i32_0 = arith.constant 0 : i32
    %c0_i32_1 = arith.constant 0 : i32
    return %c0_i32, %c0_i32_0 : i32, i32
  }
  func.func @transform_3(%arg0: i32) -> (i32, i32) {
    %c0_i32 = arith.constant 0 : i32
    %c0_i32_0 = arith.constant 0 : i32
    %c0_i32_1 = arith.constant 0 : i32
    return %c0_i32, %c0_i32_0 : i32, i32
  }
  func.func @transform_4(%arg0: i32) -> (i32, i32) {
    %c0_i32 = arith.constant 0 : i32
    %c0_i32_0 = arith.constant 0 : i32
    %c0_i32_1 = arith.constant 0 : i32
    return %c0_i32, %c0_i32_0 : i32, i32
  }
  func.func @transform_5(%arg0: i32) -> (i32, i32) {
    %c0_i32 = arith.constant 0 : i32
    %c0_i32_0 = arith.constant 0 : i32
    %c0_i32_1 = arith.constant 0 : i32
    return %c0_i32, %c0_i32_0 : i32, i32
  }
  func.func @transform_6(%arg0: i32) -> (i32, i32) {
    %c0_i32 = arith.constant 0 : i32
    %c0_i32_0 = arith.constant 0 : i32
    return %arg0, %c0_i32 : i32, i32
  }
}

</mosaic_0001>

<llo_original>
// kernel: tpu_custom_call.1
$region0: #{tpu_custom_call.1}
  #allocation0 [shape = 'u32[]', space=smem, size = 0x4, offset = 0x4, fixed_abs, tag = 'smem constant byte address 0x4 - core index']
  #allocation1 [shape = 'u32[144,128]{1,0:T(1,128)}', space=vmem, size = 0x12000, scoped, tag = 'internal scratch']
  #allocation2 [shape = 'bf16[8,64]{1,0:T(8,128)(2,1)}', space=vmem, size = 0x800, scoped, tag = 'scratch operand']
  %s0 = inlined_call_operand.vmem [shape: f32[8,32], index: 0, kind: input, shape index: {}]
  %s1 = inlined_call_operand.vmem [shape: f32[8,32], index: 1, kind: input, shape index: {}]
  %s2 = inlined_call_operand.vmem [shape: bf16[64,256], index: 2, kind: input, shape index: {}]
  %s3 = inlined_call_operand.vmem [shape: f32[1,256], index: 3, kind: input, shape index: {}]
  %s4 = inlined_call_operand.vmem [shape: bf16[256,2], index: 4, kind: input, shape index: {}]
  %s5 = inlined_call_operand.vmem [shape: f32[1,2], index: 5, kind: input, shape index: {}]
  %s6 = inlined_call_operand.vmem [shape: f32[8,2], index: 6, kind: output, shape index: {}]
  %s7 = sld [smem:[#allocation0]]
  $region34: #{tpu_custom_call.1} parent=0
    _
  %s9 = ssub.s32 1, %s7
  %s10 = scalar_select 0, %s9, %s7
  // Predicated region
  $region2: #{tpu_custom_call.1} parent=0 // pred_check
    _
  $region3: #{tpu_custom_call.1} parent=0 // pred_check_branch
    %12 = sbr.rel (0) target = $region5
  $region4: #{tpu_custom_call.1} parent=0 // pred_region
    _
  $region5: #{tpu_custom_call.1} parent=0 // pred_fallthru
    _
  // Predicated region
  $region6: #{tpu_custom_call.1} parent=0 // pred_check
    _
  $region7: #{tpu_custom_call.1} parent=0 // pred_check_branch
    %14 = sbr.rel (0) target = $region9
  $region8: #{tpu_custom_call.1} parent=0 // pred_region
    _
  $region9: #{tpu_custom_call.1} parent=0 // pred_fallthru
    _
  // Predicated region
  $region10: #{tpu_custom_call.1} parent=0 // pred_check
    _
  $region11: #{tpu_custom_call.1} parent=0 // pred_check_branch
    %16 = sbr.rel (0) target = $region13
  $region12: #{tpu_custom_call.1} parent=0 // pred_region
    _
  $region13: #{tpu_custom_call.1} parent=0 // pred_fallthru
    _
  // Predicated region
  $region14: #{tpu_custom_call.1} parent=0 // pred_check
    _
  $region15: #{tpu_custom_call.1} parent=0 // pred_check_branch
    %18 = sbr.rel (0) target = $region17
  $region16: #{tpu_custom_call.1} parent=0 // pred_region
    _
  $region17: #{tpu_custom_call.1} parent=0 // pred_fallthru
    _
  // Predicated region
  $region18: #{tpu_custom_call.1} parent=0 // pred_check
    _
  $region19: #{tpu_custom_call.1} parent=0 // pred_check_branch
    %20 = sbr.rel (0) target = $region21
  $region20: #{tpu_custom_call.1} parent=0 // pred_region
    _
  $region21: #{tpu_custom_call.1} parent=0 // pred_fallthru
    _
  // Predicated region
  $region22: #{tpu_custom_call.1} parent=0 // pred_check
    _
  $region23: #{tpu_custom_call.1} parent=0 // pred_check_branch
    %22 = sbr.rel (0) target = $region25
  $region24: #{tpu_custom_call.1} parent=0 // pred_region
    _
  $region25: #{tpu_custom_call.1} parent=0 // pred_fallthru
    _
  %v24 = vld [vmem:[%s0] sm:$0xff]
  %v25 = vpack.c.bf16 %v24, %v24
  %vm26 = vcmask 257024
  %27 = vst.msk [vmem:[#allocation2] sm:$0xf] %vm26, %v25
  %v28 = vld [vmem:[%s1] sm:$0xff]
  %v29 = vpack.c.bf16 %v28, %v28
  %v31 = vunpack.c.l.b16 %v29
  %v32 = vpack.c.b16 %v31, %v31
  %33 = vrot.lane.b32.xlu0 %v32, 32
  %v34 = vpop.permute.xlu0 %33
  %vm36 = vcmask 519424
  %37 = vst.msk [vmem:[#allocation2] sm:$0xf] %vm36, %v34
  %v38 = vld [vmem:[#allocation2] sm:$0xf]
  %v39 = vld [vmem:[%s2] sm:$0xff]
  %v40 = vld [vmem:[%s2 + $0x8] sm:$0xff]
  %v41 = vld [vmem:[%s2 + $0x10] sm:$0xff]
  %v42 = vld [vmem:[%s2 + $0x18] sm:$0xff]
  %v43 = vld [vmem:[%s2 + $0x20] sm:$0xff]
  %v44 = vld [vmem:[%s2 + $0x28] sm:$0xff]
  %v45 = vld [vmem:[%s2 + $0x30] sm:$0xff]
  %v46 = vld [vmem:[%s2 + $0x38] sm:$0xff]
  %v47 = vld [vmem:[%s3] sm:$0x3]
  %v49 = vlaneseq
  %v50 = vshrl.u32 %v49, 7
  %v51 = vsub.s32 0, %v50
  %v52 = vrot.slane %v47, %v51
  %v53 = vlaneseq
  %v54 = vshrl.u32 %v53, 7
  %v55 = vsub.s32 1, %v54
  %v56 = vrot.slane %v47, %v55
  %v67 = vunpack.c.l.b16 %v39
  %v68 = vunpack.c.h.b16 %v39
  %v69 = vunpack.c.l.b16 %v40
  %v70 = vunpack.c.h.b16 %v40
  %v71 = vunpack.c.l.b16 %v41
  %v72 = vunpack.c.h.b16 %v41
  %v73 = vunpack.c.l.b16 %v42
  %v74 = vunpack.c.h.b16 %v42
  %v75 = vunpack.c.l.b16 %v43
  %v76 = vunpack.c.h.b16 %v43
  %v77 = vunpack.c.l.b16 %v44
  %v78 = vunpack.c.h.b16 %v44
  %v79 = vunpack.c.l.b16 %v45
  %v80 = vunpack.c.h.b16 %v45
  %v81 = vunpack.c.l.b16 %v46
  %v82 = vunpack.c.h.b16 %v46
  %v83 = vpack.c.b16 %v69, %v67
  %v84 = vpack.c.b16 %v70, %v68
  %v85 = vpack.c.b16 %v73, %v71
  %v86 = vpack.c.b16 %v74, %v72
  %v87 = vpack.c.b16 %v77, %v75
  %v88 = vpack.c.b16 %v78, %v76
  %v89 = vpack.c.b16 %v81, %v79
  %v90 = vpack.c.b16 %v82, %v80
  %vm99 = vcmask 523264
  %v101 = vsel %vm99, %v38, 0
  %103 = vmatprep.subr.bf16.mxu0 0
  %104 = vmatpush1.bf16.msra.mxu0 0
  %105 = vmatprep.subr.bf16.mxu0 0
  %106 = vmatpush1.bf16.msra.mxu0 0
  %107 = vmatprep.subr.bf16.mxu0 0
  %108 = vmatpush1.bf16.msra.mxu0 0
  %109 = vmatprep.subr.bf16.mxu0 0
  %110 = vmatpush1.bf16.msra.mxu0 0
  %111 = vmatprep.subr.bf16.mxu0 %v90
  %112 = vmatpush1.bf16.msra.mxu0 %v89
  %113 = vmatprep.subr.bf16.mxu0 %v88
  %114 = vmatpush1.bf16.msra.mxu0 %v87
  %115 = vmatprep.subr.bf16.mxu0 %v86
  %116 = vmatpush1.bf16.msra.mxu0 %v85
  %117 = vmatprep.subr.bf16.mxu0 %v84
  %118 = vmatpush1.bf16.msra.mxu0 %v83
  %119 = vmatprep.subr.bf16.mxu0 0
  %120 = vmatpush2.bf16.msra.mxu0 0
  %121 = vmatprep.subr.bf16.mxu0 0
  %122 = vmatpush2.bf16.msra.mxu0 0
  %123 = vmatprep.subr.bf16.mxu0 0
  %124 = vmatpush2.bf16.msra.mxu0 0
  %125 = vmatprep.subr.bf16.mxu0 0
  %126 = vmatpush2.bf16.msra.mxu0 0
  %127 = vmatprep.subr.bf16.mxu0 0
  %128 = vmatpush2.bf16.msra.mxu0 0
  %129 = vmatprep.subr.bf16.mxu0 0
  %130 = vmatpush2.bf16.msra.mxu0 0
  %131 = vmatprep.subr.bf16.mxu0 0
  %132 = vmatpush2.bf16.msra.mxu0 0
  %133 = vmatprep.subr.bf16.mxu0 0
  %134 = vmatpush2.bf16.msra.mxu0 0
  %135 = vmatprep.mubr.bf16.mxu0 0
  %136 = vmatmul.mubr.bf16.gmra.mxu0 %v101
  %v137 = vpop.f32.mrf.mxu0
  %v138 = vadd.f32 %v52, %v137
  %v139 = vpop.f32.mrf.mxu0
  %v140 = vadd.f32 %v56, %v139
  %v141 = vpop.f32.mrf.mxu0
  %v142 = vpop.f32.mrf.mxu0
  %143 = vdwg.mxu0
  %v144 = vmax.f32 %v138, 0.0
  %v145 = vmax.f32 %v140, 0.0
  %v146 = vpack.c.bf16 %v144, %v144
  %v147 = vpack.c.bf16 %v145, %v145
  %v148 = vld [vmem:[%s4] sm:$0xf]
  %v149 = vld [vmem:[%s4 + $0x4] sm:$0xf]
  %v150 = vld [vmem:[%s4 + $0x8] sm:$0xf]
  %v151 = vld [vmem:[%s4 + $0xc] sm:$0xf]
  %v152 = vld [vmem:[%s4 + $0x10] sm:$0xf]
  %v153 = vld [vmem:[%s4 + $0x14] sm:$0xf]
  %v154 = vld [vmem:[%s4 + $0x18] sm:$0xf]
  %v155 = vld [vmem:[%s4 + $0x1c] sm:$0xf]
  %v156 = vld [vmem:[%s4 + $0x20] sm:$0xf]
  %v157 = vld [vmem:[%s4 + $0x24] sm:$0xf]
  %v158 = vld [vmem:[%s4 + $0x28] sm:$0xf]
  %v159 = vld [vmem:[%s4 + $0x2c] sm:$0xf]
  %v160 = vld [vmem:[%s4 + $0x30] sm:$0xf]
  %v161 = vld [vmem:[%s4 + $0x34] sm:$0xf]
  %v162 = vld [vmem:[%s4 + $0x38] sm:$0xf]
  %v163 = vld [vmem:[%s4 + $0x3c] sm:$0xf]
  %v164 = vld [vmem:[%s4 + $0x40] sm:$0xf]
  %v165 = vld [vmem:[%s4 + $0x44] sm:$0xf]
  %v166 = vld [vmem:[%s4 + $0x48] sm:$0xf]
  %v167 = vld [vmem:[%s4 + $0x4c] sm:$0xf]
  %v168 = vld [vmem:[%s4 + $0x50] sm:$0xf]
  %v169 = vld [vmem:[%s4 + $0x54] sm:$0xf]
  %v170 = vld [vmem:[%s4 + $0x58] sm:$0xf]
  %v171 = vld [vmem:[%s4 + $0x5c] sm:$0xf]
  %v172 = vld [vmem:[%s4 + $0x60] sm:$0xf]
  %v173 = vld [vmem:[%s4 + $0x64] sm:$0xf]
  %v174 = vld [vmem:[%s4 + $0x68] sm:$0xf]
  %v175 = vld [vmem:[%s4 + $0x6c] sm:$0xf]
  %v176 = vld [vmem:[%s4 + $0x70] sm:$0xf]
  %v177 = vld [vmem:[%s4 + $0x74] sm:$0xf]
  %v178 = vld [vmem:[%s4 + $0x78] sm:$0xf]
  %v179 = vld [vmem:[%s4 + $0x7c] sm:$0xf]
  %v180 = vld [vmem:[%s5] sm:$0x1]
  %v182 = vlaneseq
  %v183 = vshrl.u32 %v182, 7
  %v184 = vsub.s32 0, %v183
  %v185 = vrot.slane %v180, %v184
  %v219 = vunpack.c.l.b16 %v148
  %v220 = vunpack.c.l.b16 %v149
  %v221 = vunpack.c.l.b16 %v150
  %v222 = vunpack.c.l.b16 %v151
  %v223 = vunpack.c.l.b16 %v152
  %v224 = vunpack.c.l.b16 %v153
  %v225 = vunpack.c.l.b16 %v154
  %v226 = vunpack.c.l.b16 %v155
  %v227 = vunpack.c.l.b16 %v156
  %v228 = vunpack.c.l.b16 %v157
  %v229 = vunpack.c.l.b16 %v158
  %v230 = vunpack.c.l.b16 %v159
  %v231 = vunpack.c.l.b16 %v160
  %v232 = vunpack.c.l.b16 %v161
  %v233 = vunpack.c.l.b16 %v162
  %v234 = vunpack.c.l.b16 %v163
  %v235 = vunpack.c.l.b16 %v164
  %v236 = vunpack.c.l.b16 %v165
  %v237 = vunpack.c.l.b16 %v166
  %v238 = vunpack.c.l.b16 %v167
  %v239 = vunpack.c.l.b16 %v168
  %v240 = vunpack.c.l.b16 %v169
  %v241 = vunpack.c.l.b16 %v170
  %v242 = vunpack.c.l.b16 %v171
  %v243 = vunpack.c.l.b16 %v172
  %v244 = vunpack.c.l.b16 %v173
  %v245 = vunpack.c.l.b16 %v174
  %v246 = vunpack.c.l.b16 %v175
  %v247 = vunpack.c.l.b16 %v176
  %v248 = vunpack.c.l.b16 %v177
  %v249 = vunpack.c.l.b16 %v178
  %v250 = vunpack.c.l.b16 %v179
  %v251 = vpack.c.b16 %v220, %v219
  %v252 = vpack.c.b16 %v222, %v221
  %v253 = vpack.c.b16 %v224, %v223
  %v254 = vpack.c.b16 %v226, %v225
  %v255 = vpack.c.b16 %v228, %v227
  %v256 = vpack.c.b16 %v230, %v229
  %v257 = vpack.c.b16 %v232, %v231
  %v258 = vpack.c.b16 %v234, %v233
  %v259 = vpack.c.b16 %v236, %v235
  %v260 = vpack.c.b16 %v238, %v237
  %v261 = vpack.c.b16 %v240, %v239
  %v262 = vpack.c.b16 %v242, %v241
  %v263 = vpack.c.b16 %v244, %v243
  %v264 = vpack.c.b16 %v246, %v245
  %v265 = vpack.c.b16 %v248, %v247
  %v266 = vpack.c.b16 %v250, %v249
  %283 = vmatprep.subr.bf16.mxu0 0
  %284 = vmatpush1.bf16.msra.mxu0 %v258
  %285 = vmatprep.subr.bf16.mxu0 0
  %286 = vmatpush1.bf16.msra.mxu0 %v257
  %287 = vmatprep.subr.bf16.mxu0 0
  %288 = vmatpush1.bf16.msra.mxu0 %v256
  %289 = vmatprep.subr.bf16.mxu0 0
  %290 = vmatpush1.bf16.msra.mxu0 %v255
  %291 = vmatprep.subr.bf16.mxu0 0
  %292 = vmatpush1.bf16.msra.mxu0 %v254
  %293 = vmatprep.subr.bf16.mxu0 0
  %294 = vmatpush1.bf16.msra.mxu0 %v253
  %295 = vmatprep.subr.bf16.mxu0 0
  %296 = vmatpush1.bf16.msra.mxu0 %v252
  %297 = vmatprep.subr.bf16.mxu0 0
  %298 = vmatpush1.bf16.msra.mxu0 %v251
  %299 = vmatprep.subr.bf16.mxu0 0
  %300 = vmatpush2.bf16.msra.mxu0 %v266
  %301 = vmatprep.subr.bf16.mxu0 0
  %302 = vmatpush2.bf16.msra.mxu0 %v265
  %303 = vmatprep.subr.bf16.mxu0 0
  %304 = vmatpush2.bf16.msra.mxu0 %v264
  %305 = vmatprep.subr.bf16.mxu0 0
  %306 = vmatpush2.bf16.msra.mxu0 %v263
  %307 = vmatprep.subr.bf16.mxu0 0
  %308 = vmatpush2.bf16.msra.mxu0 %v262
  %309 = vmatprep.subr.bf16.mxu0 0
  %310 = vmatpush2.bf16.msra.mxu0 %v261
  %311 = vmatprep.subr.bf16.mxu0 0
  %312 = vmatpush2.bf16.msra.mxu0 %v260
  %313 = vmatprep.subr.bf16.mxu0 0
  %314 = vmatpush2.bf16.msra.mxu0 %v259
  %315 = vmatprep.mubr.bf16.mxu0 %v147
  %316 = vmatmul.mubr.bf16.gmra.mxu0 %v146
  %v317 = vpop.f32.mrf.mxu0
  %v318 = vadd.f32 %v185, %v317
  %v319 = vpop.f32.mrf.mxu0
  %v320 = vpop.f32.mrf.mxu0
  %v321 = vpop.f32.mrf.mxu0
  %322 = vdwg.mxu0
  %324 = vrot.lane.b32.xlu0 %v318, 127
  %v325 = vpop.permute.xlu0 %324
  %v327 = vmax.f32 %v318, %v325
  %v328 = vsub.f32 %v318, %v325
  %v329 = vand.u32 2147483647, %v328
  %v330 = vsub.f32 0.0, %v329
  %v331 = vmul.f32 %v330, 1.442695
  %v332 = vpow.pop %v331
  %v333 = vadd.f32 %v332, 1.0
  %v334 = vlog2.pop %v333
  %v335 = vmul.f32 %v334, 0.6931472
  %v336 = vmul.f32 -0.5, %v332
  %v337 = vadd.f32 %v336, 1.0
  %v338 = vmul.f32 %v337, %v332
  %v339 = vand.u32 2147483647, %v332
  %vm340 = vcmp.lt.f32.partialorder %v339, 0.0004427343
  %v341 = vsel %vm340, %v338, %v335
  %v342 = vadd.f32 %v327, %v341
  %344 = vset.pattern.permute.xlu0 0
  %345 = vperm.xlu0 %344, %v342
  %v346 = vpop.permute.xlu0 %345
  %v348 = vsub.f32 %v318, %v346
  %vm349 = vcmask 15360
  %350 = vst.msk [vmem:[%s6] sm:$0xff] %vm349, %v348
  // Predicated region
  $region26: #{tpu_custom_call.1} parent=0 // pred_check
    _
  $region27: #{tpu_custom_call.1} parent=0 // pred_check_branch
    %352 = sbr.rel (0) target = $region29
  $region28: #{tpu_custom_call.1} parent=0 // pred_region
    _
  $region29: #{tpu_custom_call.1} parent=0 // pred_fallthru
    _
  // Predicated region
  $region30: #{tpu_custom_call.1} parent=0 // pred_check
    _
  $region31: #{tpu_custom_call.1} parent=0 // pred_check_branch
    %354 = sbr.rel (0) target = $region33
  $region32: #{tpu_custom_call.1} parent=0 // pred_region
    _
  $region33: #{tpu_custom_call.1} parent=0 // pred_fallthru
    _

</llo_original>
